<compile_context>
chip_gen: v6e
topology: v6e:2x2x1
jax: 0.10.0
libtpu: 0.0.40
codegen_flags: <defaults>
</compile_context>

<pallas_src>
import jax
import jax.numpy as jnp
from jax.experimental import pallas as pl
from jax.experimental.pallas import tpu as pltpu


def _round_up(v, m):
    return (v + m - 1) // m * m


def gated_adapter_kernel(h_ref, x_ref, w_h_ref, w_x_ref, b_ref, o_ref):
    hp = w_h_ref.shape[-1] // 2        # lane-dense padded hidden size
    H = o_ref.shape[-1]                # true hidden size
    cdt = w_h_ref.dtype                # compute dtype for the MXU (e.g. bf16)

    h = h_ref[...]                     # [TB, H]
    x = x_ref[...]                     # [TB, I]

    # Fused projection: cols [0:Hp) gate pre-activation, [Hp:2Hp) transform.
    # Two MXU matmuls (h-part + x-part of the concatenated input), f32 accum.
    y = (jnp.dot(h.astype(cdt), w_h_ref[...], preferred_element_type=jnp.float32)
         + jnp.dot(x.astype(cdt), w_x_ref[...], preferred_element_type=jnp.float32)
         + b_ref[...])                 # [TB, 2*Hp] f32

    gate = jax.nn.sigmoid(y[:, :hp])   # lane-boundary slice
    transformed = y[:, hp:]            # lane-boundary slice
    gt = gate * transformed            # [TB, Hp] f32

    # Residual add on the true H columns; when H % 128 == 0 the slice is a
    # no-op and stores are unmasked vst.
    o_ref[...] = (h.astype(jnp.float32) + gt[:, :H]).astype(o_ref.dtype)


def prepare_gated_adapter_params(wg, bg, wt, bt, param_dtype=jnp.bfloat16):
    """One-time weight preparation (run at init, NOT per forward call).

    wg, wt: [H, H+I] in PyTorch nn.Linear layout; bg, bt: [H].
    Returns fused, [in, out]-layout parameters with UNPADDED K dims:
      w_h: [H, 2*Hp]   (gate outputs in cols 0:H, transform in cols Hp:Hp+H)
      w_x: [I, 2*Hp]
      b  : [1, 2*Hp]   (kept in f32; it adds into the f32 accumulator)
    """
    H = wg.shape[0]
    I = wg.shape[1] - H
    Hp = _round_up(H, 128)

    w_h = jnp.zeros((H, 2 * Hp), param_dtype)
    w_h = w_h.at[:, :H].set(wg[:, :H].T.astype(param_dtype))
    w_h = w_h.at[:, Hp:Hp + H].set(wt[:, :H].T.astype(param_dtype))

    w_x = jnp.zeros((I, 2 * Hp), param_dtype)
    w_x = w_x.at[:, :H].set(wg[:, H:].T.astype(param_dtype))
    w_x = w_x.at[:, Hp:Hp + H].set(wt[:, H:].T.astype(param_dtype))

    b = jnp.zeros((1, 2 * Hp), jnp.float32)
    b = b.at[0, :H].set(bg.astype(jnp.float32))
    b = b.at[0, Hp:Hp + H].set(bt.astype(jnp.float32))

    return {"w_h": w_h, "w_x": w_x, "b": b, "H": H, "I": I, "Hp": Hp}


def gated_adapter(h, x, params):
    """h: [B, H], x: [B, I]; params from prepare_gated_adapter_params."""
    H, I, Hp = params["H"], params["I"], params["Hp"]
    w_h, w_x, b = params["w_h"], params["w_x"], params["b"]
    B = h.shape[0]
    assert h.shape == (B, H) and x.shape == (B, I)

    # Batch tile: multiple of 8, capped at 256, and chosen so the grid has
    # >=2 steps when B allows it (lets v7x shard across both TensorCores).
    B8 = _round_up(max(B, 1), 8)
    TB = min(256, max(8, _round_up(pl.cdiv(B8, 2), 8)))
    grid = (pl.cdiv(B, TB),)

    # --- VMEM budget ---------------------------------------------------
    w_isz = jnp.dtype(w_h.dtype).itemsize
    a_isz = jnp.dtype(h.dtype).itemsize
    resident_w = (H + I) * 2 * Hp * w_isz + 2 * Hp * 4          # Buffered(1)
    act_bytes = 2 * TB * (H + I) * a_isz                         # h/x, 2-buf
    out_bytes = 2 * TB * H * a_isz                               # out, 2-buf
    interm_bytes = 4 * TB * 2 * Hp * 4                           # f32 y/gate/t/gt
    vmem_limit = int(1.3 * (resident_w + act_bytes + out_bytes + interm_bytes))
    vmem_limit = max(vmem_limit, 32 << 20)
    try:
        vmem_cap = int(getattr(pltpu.get_tpu_info(), "vmem_capacity_bytes",
                               64 << 20))
    except Exception:
        vmem_cap = 64 << 20
    vmem_limit = min(vmem_limit, vmem_cap)

    # --- Cost estimate (helps XLA overlap neighbors) ---------------------
    flops = 4 * B * Hp * (H + I) + 3 * B * Hp
    transcendentals = B * Hp
    bytes_accessed = ((B * (H + I) + B * H) * a_isz
                      + (H + I) * 2 * Hp * w_isz + 2 * Hp * 4)

    return pl.pallas_call(
        gated_adapter_kernel,
        out_shape=jax.ShapeDtypeStruct((B, H), h.dtype),
        grid_spec=pltpu.PrefetchScalarGridSpec(
            num_scalar_prefetch=0,
            grid=grid,
            in_specs=[
                # Streamed, double-buffered activation tiles.
                pl.BlockSpec((TB, H), lambda i: (i, 0)),
                pl.BlockSpec((TB, I), lambda i: (i, 0)),
                # Resident fused weights / bias: constant block index ->
                # single-buffered to avoid wasting VMEM.
                pl.BlockSpec((H, 2 * Hp), lambda i: (0, 0),
                             pipeline_mode=pl.Buffered(1)),
                pl.BlockSpec((I, 2 * Hp), lambda i: (0, 0),
                             pipeline_mode=pl.Buffered(1)),
                pl.BlockSpec((1, 2 * Hp), lambda i: (0, 0),
                             pipeline_mode=pl.Buffered(1)),
            ],
            out_specs=pl.BlockSpec((TB, H), lambda i: (i, 0)),
        ),
        compiler_params=pltpu.CompilerParams(
            dimension_semantics=("parallel",),
            vmem_limit_bytes=vmem_limit,
        ),
        cost_estimate=pl.CostEstimate(
            flops=flops,
            transcendentals=transcendentals,
            bytes_accessed=bytes_accessed,
        ),
    )(h, x, w_h, w_x, b)


def gated_adapter_ref(h, x, wg, bg, wt, bt):
    combined = jnp.concatenate([h, x], axis=-1)
    gate = jax.nn.sigmoid(combined @ wg.T + bg)
    transformed = combined @ wt.T + bt
    return h + gate * transformed


if __name__ == "__main__":
    B, H, I = 8, 32, 16   # batch=8, hidden_size=32, input_size=16

    key = jax.random.PRNGKey(0)
    k_h, k_x, k_wg, k_bg, k_wt, k_bt = jax.random.split(key, 6)

    h = jax.random.normal(k_h, (B, H), dtype=jnp.float32)
    x = jax.random.normal(k_x, (B, I), dtype=jnp.float32)

    # Deterministic parameter init mimicking nn.Linear (uniform +-1/sqrt(fan_in)).
    bound = 1.0 / jnp.sqrt(jnp.float32(H + I))
    wg = jax.random.uniform(k_wg, (H, H + I), jnp.float32, -bound, bound)
    bg = jax.random.uniform(k_bg, (H,), jnp.float32, -bound, bound)
    wt = jax.random.uniform(k_wt, (H, H + I), jnp.float32, -bound, bound)
    bt = jax.random.uniform(k_bt, (H,), jnp.float32, -bound, bound)

    ref = gated_adapter_ref(h, x, wg, bg, wt, bt)

    # f32 weights: bit-for-bit-tight correctness check.
    params_f32 = prepare_gated_adapter_params(wg, bg, wt, bt,
                                              param_dtype=jnp.float32)
    out_f32 = gated_adapter(h, x, params_f32)
    jax.block_until_ready(out_f32)
    assert out_f32.shape == (B, H)
    assert jnp.allclose(out_f32, ref, atol=1e-5, rtol=1e-5), "f32 mismatch"

    # bf16 fused weights (default / production path): relaxed tolerance.
    params_bf16 = prepare_gated_adapter_params(wg, bg, wt, bt,
                                               param_dtype=jnp.bfloat16)
    out_bf16 = gated_adapter(h, x, params_bf16)
    jax.block_until_ready(out_bf16)
    assert out_bf16.shape == (B, H)
    assert jnp.allclose(out_bf16, ref, atol=2e-2, rtol=2e-2), "bf16 mismatch"

    print("KERNEL_OK")
</pallas_src>

<mosaic_0001>
module attributes {stable_mosaic.version = 11 : i64} {
  func.func @gated_adapter_kernel(%arg0: i32, %arg1: memref<8x32xf32, #tpu.memory_space<vmem>>, %arg2: memref<8x16xf32, #tpu.memory_space<vmem>>, %arg3: memref<32x256xf32, #tpu.memory_space<vmem>>, %arg4: memref<16x256xf32, #tpu.memory_space<vmem>>, %arg5: memref<1x256xf32, #tpu.memory_space<vmem>>, %arg6: memref<8x32xf32, #tpu.memory_space<vmem>>) attributes {dimension_semantics = [#tpu.dimension_semantics<parallel>], iteration_bounds = array<i64: 1>, scalar_prefetch = 0 : i64, scratch_operands = 0 : i64, tpu.core_type = #tpu.core_type<tc>, window_params = [{transform_indices = @transform_0, window_bounds = array<i64: 8, 32>}, {transform_indices = @transform_1, window_bounds = array<i64: 8, 16>}, {pipeline_mode = #tpu.pipeline_mode<synchronous>, transform_indices = @transform_2, window_bounds = array<i64: 32, 256>}, {pipeline_mode = #tpu.pipeline_mode<synchronous>, transform_indices = @transform_3, window_bounds = array<i64: 16, 256>}, {pipeline_mode = #tpu.pipeline_mode<synchronous>, transform_indices = @transform_4, window_bounds = array<i64: 1, 256>}, {transform_indices = @transform_5, window_bounds = array<i64: 8, 32>}]} {
    %c0 = arith.constant 0 : index
    %c0_0 = arith.constant 0 : index
    %0 = vector.load %arg1[%c0, %c0_0] : memref<8x32xf32, #tpu.memory_space<vmem>>, vector<8x32xf32>
    %c0_1 = arith.constant 0 : index
    %c0_2 = arith.constant 0 : index
    %1 = vector.load %arg2[%c0_1, %c0_2] : memref<8x16xf32, #tpu.memory_space<vmem>>, vector<8x16xf32>
    %c0_3 = arith.constant 0 : index
    %c0_4 = arith.constant 0 : index
    %2 = vector.load %arg3[%c0_3, %c0_4] : memref<32x256xf32, #tpu.memory_space<vmem>>, vector<32x256xf32>
    %cst = arith.constant dense<0.000000e+00> : vector<8x256xf32>
    %3 = tpu.matmul %0, %2, %cst {dimension_numbers = #tpu.dot_dimension_numbers<[1], [0], [0], [1], [0, 0, 1, 1], [], []>} : vector<8x32xf32>, vector<32x256xf32>, vector<8x256xf32> -> vector<8x256xf32>
    %c0_5 = arith.constant 0 : index
    %c0_6 = arith.constant 0 : index
    %4 = vector.load %arg4[%c0_5, %c0_6] : memref<16x256xf32, #tpu.memory_space<vmem>>, vector<16x256xf32>
    %cst_7 = arith.constant dense<0.000000e+00> : vector<8x256xf32>
    %5 = tpu.matmul %1, %4, %cst_7 {dimension_numbers = #tpu.dot_dimension_numbers<[1], [0], [0], [1], [0, 0, 1, 1], [], []>} : vector<8x16xf32>, vector<16x256xf32>, vector<8x256xf32> -> vector<8x256xf32>
    %6 = arith.addf %3, %5 : vector<8x256xf32>
    %c0_8 = arith.constant 0 : index
    %c0_9 = arith.constant 0 : index
    %7 = vector.load %arg5[%c0_8, %c0_9] : memref<1x256xf32, #tpu.memory_space<vmem>>, vector<1x256xf32>
    %8 = vector.broadcast %7 : vector<1x256xf32> to vector<8x256xf32>
    %9 = arith.addf %6, %8 : vector<8x256xf32>
    %10 = vector.extract_strided_slice %9 {offsets = [0, 0], sizes = [8, 128], strides = [1, 1]} : vector<8x256xf32> to vector<8x128xf32>
    %11 = arith.negf %10 : vector<8x128xf32>
    %12 = math.exp %11 : vector<8x128xf32>
    %cst_10 = arith.constant 1.000000e+00 : f32
    %13 = vector.broadcast %cst_10 : f32 to vector<8x128xf32>
    %14 = arith.addf %13, %12 : vector<8x128xf32>
    %15 = arith.divf %13, %14 : vector<8x128xf32>
    %16 = vector.extract_strided_slice %9 {offsets = [0, 128], sizes = [8, 128], strides = [1, 1]} : vector<8x256xf32> to vector<8x128xf32>
    %17 = arith.mulf %15, %16 : vector<8x128xf32>
    %18 = vector.extract_strided_slice %17 {offsets = [0, 0], sizes = [8, 32], strides = [1, 1]} : vector<8x128xf32> to vector<8x32xf32>
    %19 = arith.addf %0, %18 : vector<8x32xf32>
    %c0_11 = arith.constant 0 : index
    %c0_12 = arith.constant 0 : index
    %20 = vector.load %arg6[%c0_11, %c0_12] : memref<8x32xf32, #tpu.memory_space<vmem>>, vector<8x32xf32>
    tpu.vector_store %arg6[%c0_11, %c0_12], %19 {strides = array<i32>} : memref<8x32xf32, #tpu.memory_space<vmem>>, vector<8x32xf32>,
    return
  }
  func.func @transform_0(%arg0: i32) -> (i32, i32) {
    %c0_i32 = arith.constant 0 : i32
    %c0_i32_0 = arith.constant 0 : i32
    return %arg0, %c0_i32 : i32, i32
  }
  func.func @transform_1(%arg0: i32) -> (i32, i32) {
    %c0_i32 = arith.constant 0 : i32
    %c0_i32_0 = arith.constant 0 : i32
    return %arg0, %c0_i32 : i32, i32
  }
  func.func @transform_2(%arg0: i32) -> (i32, i32) {
    %c0_i32 = arith.constant 0 : i32
    %c0_i32_0 = arith.constant 0 : i32
    %c0_i32_1 = arith.constant 0 : i32
    return %c0_i32, %c0_i32_0 : i32, i32
  }
  func.func @transform_3(%arg0: i32) -> (i32, i32) {
    %c0_i32 = arith.constant 0 : i32
    %c0_i32_0 = arith.constant 0 : i32
    %c0_i32_1 = arith.constant 0 : i32
    return %c0_i32, %c0_i32_0 : i32, i32
  }
  func.func @transform_4(%arg0: i32) -> (i32, i32) {
    %c0_i32 = arith.constant 0 : i32
    %c0_i32_0 = arith.constant 0 : i32
    %c0_i32_1 = arith.constant 0 : i32
    return %c0_i32, %c0_i32_0 : i32, i32
  }
  func.func @transform_5(%arg0: i32) -> (i32, i32) {
    %c0_i32 = arith.constant 0 : i32
    %c0_i32_0 = arith.constant 0 : i32
    return %arg0, %c0_i32 : i32, i32
  }
}

</mosaic_0001>

<llo_original>
// kernel: tpu_custom_call.1
$region0: #{tpu_custom_call.1}
  #allocation0 [shape = 'u32[]', space=smem, size = 0x4, offset = 0x4, fixed_abs, tag = 'smem constant byte address 0x4 - core index']
  #allocation1 [shape = 'u32[144,128]{1,0:T(1,128)}', space=vmem, size = 0x12000, scoped, tag = 'internal scratch']
  %s0 = inlined_call_operand.hbm [shape: f32[8,32], index: 0, kind: input, shape index: {}]
  %s1 = inlined_call_operand.hbm [shape: f32[8,16], index: 1, kind: input, shape index: {}]
  %s2 = inlined_call_operand.hbm [shape: f32[32,256], index: 2, kind: input, shape index: {}]
  %s3 = inlined_call_operand.hbm [shape: f32[16,256], index: 3, kind: input, shape index: {}]
  %s4 = inlined_call_operand.vmem [shape: f32[1,256], index: 4, kind: input, shape index: {}]
  %s5 = inlined_call_operand.hbm [shape: f32[8,32], index: 5, kind: output, shape index: {}]
  %s6 = sld [smem:[#allocation0]]
  $region46: #{tpu_custom_call.1} parent=0
    _
  %s8 = ssub.s32 1, %s6
  %s9 = scalar_select 0, %s8, %s6
  $region1: #{tpu_custom_call.1} parent=0
    #allocation2 [shape = 'u8[4096]{0}', space=vmem, size = 0x1000, scoped, tag = 'input window, operand 0, single buffered']
    #allocation3 [shape = 's32[1]{0}', space=sflag, size = 0x4, scoped, tag = 'scoped memory for tpu_custom_call.1']
    #allocation4 [shape = 's32[1]{0}', space=sflag, size = 0x4, scoped, tag = 'scoped memory for tpu_custom_call.1']
    #allocation5 [shape = 'u8[4096]{0}', space=vmem, size = 0x1000, scoped, tag = 'input window, operand 1, single buffered']
    #allocation6 [shape = 's32[1]{0}', space=sflag, size = 0x4, scoped, tag = 'scoped memory for tpu_custom_call.1']
    #allocation7 [shape = 'u8[32768]{0}', space=vmem, size = 0x8000, scoped, tag = 'input window, operand 2, single buffered']
    #allocation8 [shape = 'u8[16384]{0}', space=vmem, size = 0x4000, scoped, tag = 'input window, operand 3, single buffered']
    #allocation9 [shape = 's32[1]{0}', space=sflag, size = 0x4, scoped, tag = 'scoped memory for tpu_custom_call.1']
    #allocation10 [shape = 'u8[4096]{0}', space=vmem, size = 0x1000, scoped, tag = 'output window, operand 0, single buffered']
    %10 = vsyncpa [#allocation3], 0
    %11 = vsyncpa [#allocation6], 0
    %12 = vsyncpa [#allocation9], 0
    %13 = vsyncpa [#allocation4], 0
    // Predicated region
    $region2: #{tpu_custom_call.1} parent=1 // pred_check
      _
    $region3: #{tpu_custom_call.1} parent=1 // pred_check_branch
      %15 = sbr.rel (0) target = $region5
    $region4: #{tpu_custom_call.1} parent=1 // pred_region
      %s17 = ssub.s32 128, 128
      %18 = vsyncadd [#allocation3], %s17
      %s20 = sshll.u32 [#allocation2], 4
      %s21 = int_to_ptr.vmem [resolvable:$true] %s20
      %23 = dma.hbm_to_vmem [thread:$0]  %s0, 128, %s21, [#allocation3]
    $region5: #{tpu_custom_call.1} parent=1 // pred_fallthru
      _
    // Predicated region
    $region6: #{tpu_custom_call.1} parent=1 // pred_check
      _
    $region7: #{tpu_custom_call.1} parent=1 // pred_check_branch
      %25 = sbr.rel (0) target = $region9
    $region8: #{tpu_custom_call.1} parent=1 // pred_region
      %s27 = ssub.s32 128, 128
      %28 = vsyncadd [#allocation6], %s27
      %s30 = sshll.u32 [#allocation5], 4
      %s31 = int_to_ptr.vmem [resolvable:$true] %s30
      %33 = dma.hbm_to_vmem [thread:$0]  %s1, 128, %s31, [#allocation6]
    $region9: #{tpu_custom_call.1} parent=1 // pred_fallthru
      _
    // Predicated region
    $region10: #{tpu_custom_call.1} parent=1 // pred_check
      _
    $region11: #{tpu_custom_call.1} parent=1 // pred_check_branch
      %35 = sbr.rel (0) target = $region13
    $region12: #{tpu_custom_call.1} parent=1 // pred_region
      %s37 = ssub.s32 1024, 1024
      %38 = vsyncadd [#allocation6], %s37
      %s39 = sshll.u32 [#allocation7], 4
      %s40 = int_to_ptr.vmem [resolvable:$true] %s39
      %45 = dma.hbm_to_vmem [thread:$0]  %s2, 1024, %s40, [#allocation6], 256, 256, 16
    $region13: #{tpu_custom_call.1} parent=1 // pred_fallthru
      _
    // Predicated region
    $region14: #{tpu_custom_call.1} parent=1 // pred_check
      _
    $region15: #{tpu_custom_call.1} parent=1 // pred_check_branch
      %47 = sbr.rel (0) target = $region17
    $region16: #{tpu_custom_call.1} parent=1 // pred_region
      %s49 = ssub.s32 512, 512
      %50 = vsyncadd [#allocation9], %s49
      %s51 = sshll.u32 [#allocation8], 4
      %s52 = int_to_ptr.vmem [resolvable:$true] %s51
      %57 = dma.hbm_to_vmem [thread:$0]  %s3, 512, %s52, [#allocation9], 256, 256, 16
    $region17: #{tpu_custom_call.1} parent=1 // pred_fallthru
      _
    // Predicated region
    $region18: #{tpu_custom_call.1} parent=1 // pred_check
      _
    $region19: #{tpu_custom_call.1} parent=1 // pred_check_branch
      %59 = sbr.rel (0) target = $region21
    $region20: #{tpu_custom_call.1} parent=1 // pred_region
      _
    $region21: #{tpu_custom_call.1} parent=1 // pred_fallthru
      _
    // Predicated region
    $region22: #{tpu_custom_call.1} parent=1 // pred_check
      _
    $region23: #{tpu_custom_call.1} parent=1 // pred_check_branch
      %61 = sbr.rel (0) target = $region25
    $region24: #{tpu_custom_call.1} parent=1 // pred_region
      %62 = dma.done [#allocation3], 128
    $region25: #{tpu_custom_call.1} parent=1 // pred_fallthru
      _
    // Predicated region
    $region26: #{tpu_custom_call.1} parent=1 // pred_check
      _
    $region27: #{tpu_custom_call.1} parent=1 // pred_check_branch
      %64 = sbr.rel (0) target = $region29
    $region28: #{tpu_custom_call.1} parent=1 // pred_region
      %65 = dma.done [#allocation6], 128
    $region29: #{tpu_custom_call.1} parent=1 // pred_fallthru
      _
    // Predicated region
    $region30: #{tpu_custom_call.1} parent=1 // pred_check
      _
    $region31: #{tpu_custom_call.1} parent=1 // pred_check_branch
      %67 = sbr.rel (0) target = $region33
    $region32: #{tpu_custom_call.1} parent=1 // pred_region
      %68 = dma.done [#allocation6], 1024
    $region33: #{tpu_custom_call.1} parent=1 // pred_fallthru
      _
    // Predicated region
    $region34: #{tpu_custom_call.1} parent=1 // pred_check
      _
    $region35: #{tpu_custom_call.1} parent=1 // pred_check_branch
      %70 = sbr.rel (0) target = $region37
    $region36: #{tpu_custom_call.1} parent=1 // pred_region
      %71 = dma.done [#allocation9], 512
    $region37: #{tpu_custom_call.1} parent=1 // pred_fallthru
      _
    %v72 = vld [vmem:[#allocation2] sm:$0xff]
    %v73 = vld [vmem:[#allocation5] sm:$0xff]
    %v74 = vld [vmem:[#allocation7] sm:$0xff]
    %v75 = vld [vmem:[#allocation7 + $0x8] sm:$0xff]
    %v76 = vld [vmem:[#allocation7 + $0x10] sm:$0xff]
    %v77 = vld [vmem:[#allocation7 + $0x18] sm:$0xff]
    %v78 = vld [vmem:[#allocation7 + $0x20] sm:$0xff]
    %v79 = vld [vmem:[#allocation7 + $0x28] sm:$0xff]
    %v80 = vld [vmem:[#allocation7 + $0x30] sm:$0xff]
    %v81 = vld [vmem:[#allocation7 + $0x38] sm:$0xff]
    %v82 = vld [vmem:[#allocation8] sm:$0xff]
    %v83 = vld [vmem:[#allocation8 + $0x8] sm:$0xff]
    %v84 = vld [vmem:[#allocation8 + $0x10] sm:$0xff]
    %v85 = vld [vmem:[#allocation8 + $0x18] sm:$0xff]
    %vm86 = vcmask 130048
    %v88 = vsel %vm86, %v73, 0
    %90 = vmatprep.subr.mxu0 0.0
    %91 = vmatpush1.msra.mxu0 0.0
    %92 = vmatprep.subr.mxu0 0.0
    %93 = vmatpush1.msra.mxu0 0.0
    %94 = vmatprep.subr.mxu0 0.0
    %95 = vmatpush1.msra.mxu0 0.0
    %96 = vmatprep.subr.mxu0 0.0
    %97 = vmatpush1.msra.mxu0 0.0
    %98 = vmatprep.subr.mxu0 0.0
    %99 = vmatpush1.msra.mxu0 0.0
    %100 = vmatprep.subr.mxu0 0.0
    %101 = vmatpush1.msra.mxu0 0.0
    %102 = vmatprep.subr.mxu0 0.0
    %103 = vmatpush1.msra.mxu0 0.0
    %104 = vmatprep.subr.mxu0 0.0
    %105 = vmatpush1.msra.mxu0 0.0
    %106 = vmatprep.subr.mxu0 0.0
    %107 = vmatpush1.msra.mxu0 0.0
    %108 = vmatprep.subr.mxu0 0.0
    %109 = vmatpush1.msra.mxu0 0.0
    %110 = vmatprep.subr.mxu0 0.0
    %111 = vmatpush1.msra.mxu0 0.0
    %112 = vmatprep.subr.mxu0 0.0
    %113 = vmatpush1.msra.mxu0 0.0
    %114 = vmatprep.subr.mxu0 0.0
    %115 = vmatpush1.msra.mxu0 0.0
    %116 = vmatprep.subr.mxu0 0.0
    %117 = vmatpush1.msra.mxu0 0.0
    %118 = vmatprep.subr.mxu0 %v85
    %119 = vmatpush1.msra.mxu0 %v84
    %120 = vmatprep.subr.mxu0 %v83
    %121 = vmatpush1.msra.mxu0 %v82
    %122 = vmatprep.subr.mxu0 0.0
    %123 = vmatpush2.msra.mxu0 0.0
    %124 = vmatprep.subr.mxu0 0.0
    %125 = vmatpush2.msra.mxu0 0.0
    %126 = vmatprep.subr.mxu0 0.0
    %127 = vmatpush2.msra.mxu0 0.0
    %128 = vmatprep.subr.mxu0 0.0
    %129 = vmatpush2.msra.mxu0 0.0
    %130 = vmatprep.subr.mxu0 0.0
    %131 = vmatpush2.msra.mxu0 0.0
    %132 = vmatprep.subr.mxu0 0.0
    %133 = vmatpush2.msra.mxu0 0.0
    %134 = vmatprep.subr.mxu0 0.0
    %135 = vmatpush2.msra.mxu0 0.0
    %136 = vmatprep.subr.mxu0 0.0
    %137 = vmatpush2.msra.mxu0 0.0
    %138 = vmatprep.subr.mxu0 0.0
    %139 = vmatpush2.msra.mxu0 0.0
    %140 = vmatprep.subr.mxu0 0.0
    %141 = vmatpush2.msra.mxu0 0.0
    %142 = vmatprep.subr.mxu0 0.0
    %143 = vmatpush2.msra.mxu0 0.0
    %144 = vmatprep.subr.mxu0 0.0
    %145 = vmatpush2.msra.mxu0 0.0
    %146 = vmatprep.subr.mxu0 0.0
    %147 = vmatpush2.msra.mxu0 0.0
    %148 = vmatprep.subr.mxu0 0.0
    %149 = vmatpush2.msra.mxu0 0.0
    %150 = vmatprep.subr.mxu0 0.0
    %151 = vmatpush2.msra.mxu0 0.0
    %152 = vmatprep.subr.mxu0 0.0
    %153 = vmatpush2.msra.mxu0 0.0
    %154 = vmatprep.mubr.f32.mxu0 0.0
    %155 = vmatmul.mubr.f32.gmra.mxu0 %v88
    %v156 = vpop.f32.mrf.mxu0
    %v157 = vadd.f32 0.0, %v156
    %v158 = vpop.f32.mrf.mxu0
    %v159 = vadd.f32 0.0, %v158
    %160 = vdwg.mxu0
    %vm161 = vcmask 261120
    %v163 = vsel %vm161, %v72, 0
    %165 = vmatprep.subr.mxu0 0.0
    %166 = vmatpush1.msra.mxu0 0.0
    %167 = vmatprep.subr.mxu0 0.0
    %168 = vmatpush1.msra.mxu0 0.0
    %169 = vmatprep.subr.mxu0 0.0
    %170 = vmatpush1.msra.mxu0 0.0
    %171 = vmatprep.subr.mxu0 0.0
    %172 = vmatpush1.msra.mxu0 0.0
    %173 = vmatprep.subr.mxu0 0.0
    %174 = vmatpush1.msra.mxu0 0.0
    %175 = vmatprep.subr.mxu0 0.0
    %176 = vmatpush1.msra.mxu0 0.0
    %177 = vmatprep.subr.mxu0 0.0
    %178 = vmatpush1.msra.mxu0 0.0
    %179 = vmatprep.subr.mxu0 0.0
    %180 = vmatpush1.msra.mxu0 0.0
    %181 = vmatprep.subr.mxu0 0.0
    %182 = vmatpush1.msra.mxu0 0.0
    %183 = vmatprep.subr.mxu0 0.0
    %184 = vmatpush1.msra.mxu0 0.0
    %185 = vmatprep.subr.mxu0 0.0
    %186 = vmatpush1.msra.mxu0 0.0
    %187 = vmatprep.subr.mxu0 0.0
    %188 = vmatpush1.msra.mxu0 0.0
    %189 = vmatprep.subr.mxu0 %v81
    %190 = vmatpush1.msra.mxu0 %v80
    %191 = vmatprep.subr.mxu0 %v79
    %192 = vmatpush1.msra.mxu0 %v78
    %193 = vmatprep.subr.mxu0 %v77
    %194 = vmatpush1.msra.mxu0 %v76
    %195 = vmatprep.subr.mxu0 %v75
    %196 = vmatpush1.msra.mxu0 %v74
    %197 = vmatprep.subr.mxu0 0.0
    %198 = vmatpush2.msra.mxu0 0.0
    %199 = vmatprep.subr.mxu0 0.0
    %200 = vmatpush2.msra.mxu0 0.0
    %201 = vmatprep.subr.mxu0 0.0
    %202 = vmatpush2.msra.mxu0 0.0
    %203 = vmatprep.subr.mxu0 0.0
    %204 = vmatpush2.msra.mxu0 0.0
    %205 = vmatprep.subr.mxu0 0.0
    %206 = vmatpush2.msra.mxu0 0.0
    %207 = vmatprep.subr.mxu0 0.0
    %208 = vmatpush2.msra.mxu0 0.0
    %209 = vmatprep.subr.mxu0 0.0
    %210 = vmatpush2.msra.mxu0 0.0
    %211 = vmatprep.subr.mxu0 0.0
    %212 = vmatpush2.msra.mxu0 0.0
    %213 = vmatprep.subr.mxu0 0.0
    %214 = vmatpush2.msra.mxu0 0.0
    %215 = vmatprep.subr.mxu0 0.0
    %216 = vmatpush2.msra.mxu0 0.0
    %217 = vmatprep.subr.mxu0 0.0
    %218 = vmatpush2.msra.mxu0 0.0
    %219 = vmatprep.subr.mxu0 0.0
    %220 = vmatpush2.msra.mxu0 0.0
    %221 = vmatprep.subr.mxu0 0.0
    %222 = vmatpush2.msra.mxu0 0.0
    %223 = vmatprep.subr.mxu0 0.0
    %224 = vmatpush2.msra.mxu0 0.0
    %225 = vmatprep.subr.mxu0 0.0
    %226 = vmatpush2.msra.mxu0 0.0
    %227 = vmatprep.subr.mxu0 0.0
    %228 = vmatpush2.msra.mxu0 0.0
    %229 = vmatprep.mubr.f32.mxu0 0.0
    %230 = vmatmul.mubr.f32.gmra.mxu0 %v163
    %v231 = vpop.f32.mrf.mxu0
    %v232 = vadd.f32 %v157, %v231
    %v233 = vpop.f32.mrf.mxu0
    %v234 = vadd.f32 %v159, %v233
    %235 = vdwg.mxu0
    %v236 = vld [vmem:[%s4] sm:$0x3]
    %v238 = vlaneseq
    %v239 = vshrl.u32 %v238, 7
    %v240 = vsub.s32 0, %v239
    %v241 = vrot.slane %v236, %v240
    %v242 = vlaneseq
    %v243 = vshrl.u32 %v242, 7
    %v244 = vsub.s32 1, %v243
    %v245 = vrot.slane %v236, %v244
    %v248 = vadd.f32 %v232, %v241
    %v249 = vadd.f32 %v234, %v245
    %v250 = vxor.u32 %v248, 2147483648
    %v251 = vmul.f32 %v250, 1.442695
    %v252 = vpow.pop %v251
    %v253 = vadd.f32 %v252, 1.0
    %v254 = vrcp.pop %v253
    %v255 = vmul.f32 1.0, %v254
    %v256 = vmul.f32 %v255, %v249
    %v257 = vadd.f32 %v72, %v256
    %258 = vst.msk [vmem:[#allocation10] sm:$0xff] %vm161, %v257
    // Predicated region
    $region38: #{tpu_custom_call.1} parent=1 // pred_check
      _
    $region39: #{tpu_custom_call.1} parent=1 // pred_check_branch
      %260 = sbr.rel (0) target = $region41
    $region40: #{tpu_custom_call.1} parent=1 // pred_region
      %s262 = ssub.s32 128, 128
      %263 = vsyncadd [#allocation4], %s262
      %s265 = sshll.u32 [#allocation10], 4
      %s266 = int_to_ptr.vmem [resolvable:$true] %s265
      %268 = dma.vmem_to_hbm [thread:$0]  %s266, 128, %s5, [#allocation4]
    $region41: #{tpu_custom_call.1} parent=1 // pred_fallthru
      _
    // Predicated region
    $region42: #{tpu_custom_call.1} parent=1 // pred_check
      _
    $region43: #{tpu_custom_call.1} parent=1 // pred_check_branch
      %270 = sbr.rel (0) target = $region45
    $region44: #{tpu_custom_call.1} parent=1 // pred_region
      %271 = dma.done [#allocation4], 128
    $region45: #{tpu_custom_call.1} parent=1 // pred_fallthru
      _
    %272 = vsyncpa [#allocation3], 1
    %273 = vsyncpa [#allocation6], 1
    %274 = vsyncpa [#allocation9], 1
    %275 = vsyncpa [#allocation4], 1

</llo_original>
